<compile_context>
chip_gen: v5e
topology: v5e:2x2
jax: 0.10.0
libtpu: 0.0.40
codegen_flags: <defaults>
</compile_context>

<pallas_src>
import math
import functools

import jax
import jax.numpy as jnp
from jax import lax
from jax.experimental import pallas as pl
from jax.experimental.pallas import tpu as pltpu


def _round_up(x, m):
    return (x + m - 1) // m * m


def _decoder_kernel(d_model, o_valid, compute_dtype,
                    q_ref, k_ref, v_ref, wq_ref, wc_ref, b_ref, o_ref):
    bblk, lq, d = q_ref.shape
    o_pad = o_ref.shape[-1]

    q = q_ref[...]                                   # (Bblk, Lq, D) f32
    k = k_ref[...]                                   # (Bblk, Lk, D) f32
    v = v_ref[...]                                   # (Bblk, Lk, D) f32

    # ---- scaled dot-product attention (bf16 MXU inputs, f32 accumulate) ----
    scale = 1.0 / math.sqrt(d_model)
    q_s = (q * scale).astype(compute_dtype)          # prescale q: Lq*D mults
    scores = jnp.einsum('bqd,bkd->bqk', q_s, k.astype(compute_dtype),
                        preferred_element_type=jnp.float32)      # (Bblk, Lq, Lk)

    m1 = jnp.max(scores, axis=-1, keepdims=True)
    e1 = jnp.exp(scores - m1)
    s1 = jnp.sum(e1, axis=-1, keepdims=True)
    attn = e1 * pl.reciprocal(s1, approx=True)       # EUP slot, otherwise idle

    context = jnp.einsum('bqk,bkd->bqd',
                         attn.astype(compute_dtype), v.astype(compute_dtype),
                         preferred_element_type=jnp.float32)     # (Bblk, Lq, D)

    # ---- fc(concat([q, context], -1)) as one flattened matmul pair ----
    q2 = q.reshape(bblk * lq, d).astype(compute_dtype)
    c2 = context.reshape(bblk * lq, d).astype(compute_dtype)
    logits = (jnp.dot(q2, wq_ref[...], preferred_element_type=jnp.float32)
              + jnp.dot(c2, wc_ref[...], preferred_element_type=jnp.float32)
              + b_ref[...])                          # (Bblk*Lq, O_pad) f32

    # ---- final softmax over the (possibly lane-padded) output dim ----
    if o_valid != o_pad:
        col = lax.broadcasted_iota(jnp.int32, logits.shape, 1)
        logits = jnp.where(col < o_valid, logits, -jnp.inf)
    m2 = jnp.max(logits, axis=-1, keepdims=True)
    e2 = jnp.exp(logits - m2)
    s2 = jnp.sum(e2, axis=-1, keepdims=True)
    probs = e2 * pl.reciprocal(s2, approx=False)

    o_ref[...] = probs.reshape(bblk, lq, o_pad).astype(o_ref.dtype)


def decoder_forward(query, keys, values, W, b, *, block_b=8,
                    compute_dtype=jnp.bfloat16):
    """query:[B,Lq,D] keys/values:[B,Lk,D] W:[2D,O] b:[1,O] -> [B,Lq,O]."""
    B, Lq, D = query.shape
    _, Lk, _ = keys.shape
    assert W.shape[0] == 2 * D, "fc expects input_size == 2*D (concat of q and context)"
    O = W.shape[1]

    bblk = min(block_b, B)
    B_pad = _round_up(B, bblk)
    O_pad = _round_up(O, 128)                        # lane-dense output slab

    if B_pad != B:
        pad_b = ((0, B_pad - B), (0, 0), (0, 0))
        query = jnp.pad(query, pad_b)
        keys = jnp.pad(keys, pad_b)
        values = jnp.pad(values, pad_b)

    # Split W into q-part and context-part, pad output dim, cast weights to bf16.
    Wq, Wc = W[:D], W[D:]
    if O_pad != O:
        Wq = jnp.pad(Wq, ((0, 0), (0, O_pad - O)))
        Wc = jnp.pad(Wc, ((0, 0), (0, O_pad - O)))
        b = jnp.pad(b, ((0, 0), (0, O_pad - O)))
    Wq = Wq.astype(compute_dtype)
    Wc = Wc.astype(compute_dtype)
    b = b.astype(jnp.float32)

    kernel = functools.partial(_decoder_kernel, D, O, compute_dtype)
    out = pl.pallas_call(
        kernel,
        out_shape=jax.ShapeDtypeStruct((B_pad, Lq, O_pad), query.dtype),
        grid_spec=pltpu.PrefetchScalarGridSpec(
            num_scalar_prefetch=0,
            grid=(B_pad // bblk,),
            in_specs=[
                pl.BlockSpec((bblk, Lq, D), lambda bi: (bi, 0, 0)),
                pl.BlockSpec((bblk, Lk, D), lambda bi: (bi, 0, 0)),
                pl.BlockSpec((bblk, Lk, D), lambda bi: (bi, 0, 0)),
                pl.BlockSpec((D, O_pad), lambda bi: (0, 0)),
                pl.BlockSpec((D, O_pad), lambda bi: (0, 0)),
                pl.BlockSpec((1, O_pad), lambda bi: (0, 0)),
            ],
            out_specs=pl.BlockSpec((bblk, Lq, O_pad), lambda bi: (bi, 0, 0)),
        ),
        compiler_params=pltpu.CompilerParams(
            dimension_semantics=("parallel",)),
    )(query, keys, values, Wq, Wc, b)

    return out[:B, :, :O]


def decoder_reference(query, keys, values, W, b):
    D = query.shape[-1]
    scores = jnp.einsum("bqd,bkd->bqk", query, keys) / math.sqrt(D)
    attn = jax.nn.softmax(scores, axis=-1)
    context = jnp.einsum("bqk,bkd->bqd", attn, values)
    concat = jnp.concatenate([query, context], axis=-1)
    logits = concat @ W + b[0]
    return jax.nn.softmax(logits, axis=-1)


if __name__ == "__main__":
    # Small shapes consistent with the module: D = input_size // 2, O = output_size.
    B, Lq, Lk, D, O = 2, 8, 8, 32, 32
    key = jax.random.PRNGKey(0)
    kq, kk, kv, kw, kb = jax.random.split(key, 5)

    query = jax.random.normal(kq, (B, Lq, D), dtype=jnp.float32)
    keys = jax.random.normal(kk, (B, Lk, D), dtype=jnp.float32)
    values = jax.random.normal(kv, (B, Lk, D), dtype=jnp.float32)

    # nn.Linear(input_size=2*D, output_size=O) parameters, deterministic init.
    bound = 1.0 / math.sqrt(2 * D)
    W = jax.random.uniform(kw, (2 * D, O), dtype=jnp.float32,
                           minval=-bound, maxval=bound)
    bvec = jax.random.uniform(kb, (1, O), dtype=jnp.float32,
                              minval=-bound, maxval=bound)

    out = decoder_forward(query, keys, values, W, bvec)
    out = jax.block_until_ready(out)

    ref = decoder_reference(query, keys, values, W, bvec)
    assert out.shape == (B, Lq, O)
    # bf16 MXU operands (f32 accumulation) -> allow bf16-level rounding.
    assert jnp.allclose(out, ref, atol=2e-2, rtol=2e-2), "mismatch vs reference"

    print("KERNEL_OK")
</pallas_src>

<mosaic_0001>
module attributes {stable_mosaic.version = 11 : i64} {
  func.func @_decoder_kernel(%arg0: i32, %arg1: memref<2x8x32xf32, #tpu.memory_space<vmem>>, %arg2: memref<2x8x32xf32, #tpu.memory_space<vmem>>, %arg3: memref<2x8x32xf32, #tpu.memory_space<vmem>>, %arg4: memref<32x128xbf16, #tpu.memory_space<vmem>>, %arg5: memref<32x128xbf16, #tpu.memory_space<vmem>>, %arg6: memref<1x128xf32, #tpu.memory_space<vmem>>, %arg7: memref<2x8x128xf32, #tpu.memory_space<vmem>>) attributes {dimension_semantics = [#tpu.dimension_semantics<parallel>], iteration_bounds = array<i64: 1>, scalar_prefetch = 0 : i64, scratch_operands = 0 : i64, tpu.core_type = #tpu.core_type<tc>, window_params = [{transform_indices = @transform_0, window_bounds = array<i64: 2, 8, 32>}, {transform_indices = @transform_1, window_bounds = array<i64: 2, 8, 32>}, {transform_indices = @transform_2, window_bounds = array<i64: 2, 8, 32>}, {pipeline_mode = #tpu.pipeline_mode<synchronous>, transform_indices = @transform_3, window_bounds = array<i64: 32, 128>}, {pipeline_mode = #tpu.pipeline_mode<synchronous>, transform_indices = @transform_4, window_bounds = array<i64: 32, 128>}, {pipeline_mode = #tpu.pipeline_mode<synchronous>, transform_indices = @transform_5, window_bounds = array<i64: 1, 128>}, {transform_indices = @transform_6, window_bounds = array<i64: 2, 8, 128>}]} {
    %c0 = arith.constant 0 : index
    %c0_0 = arith.constant 0 : index
    %c0_1 = arith.constant 0 : index
    %0 = vector.load %arg1[%c0, %c0_0, %c0_1] : memref<2x8x32xf32, #tpu.memory_space<vmem>>, vector<2x8x32xf32>
    %c0_2 = arith.constant 0 : index
    %c0_3 = arith.constant 0 : index
    %c0_4 = arith.constant 0 : index
    %1 = vector.load %arg2[%c0_2, %c0_3, %c0_4] : memref<2x8x32xf32, #tpu.memory_space<vmem>>, vector<2x8x32xf32>
    %c0_5 = arith.constant 0 : index
    %c0_6 = arith.constant 0 : index
    %c0_7 = arith.constant 0 : index
    %2 = vector.load %arg3[%c0_5, %c0_6, %c0_7] : memref<2x8x32xf32, #tpu.memory_space<vmem>>, vector<2x8x32xf32>
    %cst = arith.constant 0.176776692 : f32
    %3 = vector.broadcast %cst : f32 to vector<2x8x32xf32>
    %4 = arith.mulf %0, %3 : vector<2x8x32xf32>
    %5 = arith.truncf %4 : vector<2x8x32xf32> to vector<2x8x32xbf16>
    %6 = arith.truncf %1 : vector<2x8x32xf32> to vector<2x8x32xbf16>
    "tpu.trace_start"() <{level = 10 : i32, message = "bqd,bkd->bqk"}> : () -> ()
    %cst_8 = arith.constant dense<0.000000e+00> : vector<2x8x8xf32>
    %7 = tpu.matmul %5, %6, %cst_8 {dimension_numbers = #tpu.dot_dimension_numbers<[2], [2], [1], [1], [0, 0, 0, 1, 1, 1], [0], [0]>} : vector<2x8x32xbf16>, vector<2x8x32xbf16>, vector<2x8x8xf32> -> vector<2x8x8xf32>
    "tpu.trace_stop"() : () -> ()
    %cst_9 = arith.constant dense<0xFF800000> : vector<2x8xf32>
    %8 = vector.multi_reduction <maximumf>, %7, %cst_9 [2] : vector<2x8x8xf32> to vector<2x8xf32>
    %9 = vector.shape_cast %8 : vector<2x8xf32> to vector<2x8x1xf32>
    %10 = vector.broadcast %9 : vector<2x8x1xf32> to vector<2x8x8xf32>
    %11 = arith.subf %7, %10 : vector<2x8x8xf32>
    %12 = math.exp %11 : vector<2x8x8xf32>
    %cst_10 = arith.constant dense<0.000000e+00> : vector<2x8xf32>
    %13 = vector.multi_reduction <add>, %12, %cst_10 [2] : vector<2x8x8xf32> to vector<2x8xf32>
    %14 = vector.shape_cast %13 : vector<2x8xf32> to vector<2x8x1xf32>
    %15 = tpu.reciprocal %14 {approx = true} : vector<2x8x1xf32> -> vector<2x8x1xf32>
    %16 = vector.broadcast %15 : vector<2x8x1xf32> to vector<2x8x8xf32>
    %17 = arith.mulf %12, %16 : vector<2x8x8xf32>
    %18 = arith.truncf %17 : vector<2x8x8xf32> to vector<2x8x8xbf16>
    %19 = arith.truncf %2 : vector<2x8x32xf32> to vector<2x8x32xbf16>
    "tpu.trace_start"() <{level = 10 : i32, message = "bqk,bkd->bqd"}> : () -> ()
    %cst_11 = arith.constant dense<0.000000e+00> : vector<2x8x32xf32>
    %20 = tpu.matmul %18, %19, %cst_11 {dimension_numbers = #tpu.dot_dimension_numbers<[2], [1], [1], [2], [0, 0, 0, 1, 1, 2], [0], [0]>} : vector<2x8x8xbf16>, vector<2x8x32xbf16>, vector<2x8x32xf32> -> vector<2x8x32xf32>
    "tpu.trace_stop"() : () -> ()
    %21 = vector.shape_cast %0 : vector<2x8x32xf32> to vector<16x32xf32>
    %22 = arith.truncf %21 : vector<16x32xf32> to vector<16x32xbf16>
    %23 = vector.shape_cast %20 : vector<2x8x32xf32> to vector<16x32xf32>
    %24 = arith.truncf %23 : vector<16x32xf32> to vector<16x32xbf16>
    %c0_12 = arith.constant 0 : index
    %c0_13 = arith.constant 0 : index
    %25 = vector.load %arg4[%c0_12, %c0_13] : memref<32x128xbf16, #tpu.memory_space<vmem>>, vector<32x128xbf16>
    %cst_14 = arith.constant dense<0.000000e+00> : vector<16x128xf32>
    %26 = tpu.matmul %22, %25, %cst_14 {dimension_numbers = #tpu.dot_dimension_numbers<[1], [0], [0], [1], [0, 0, 1, 1], [], []>} : vector<16x32xbf16>, vector<32x128xbf16>, vector<16x128xf32> -> vector<16x128xf32>
    %c0_15 = arith.constant 0 : index
    %c0_16 = arith.constant 0 : index
    %27 = vector.load %arg5[%c0_15, %c0_16] : memref<32x128xbf16, #tpu.memory_space<vmem>>, vector<32x128xbf16>
    %cst_17 = arith.constant dense<0.000000e+00> : vector<16x128xf32>
    %28 = tpu.matmul %24, %27, %cst_17 {dimension_numbers = #tpu.dot_dimension_numbers<[1], [0], [0], [1], [0, 0, 1, 1], [], []>} : vector<16x32xbf16>, vector<32x128xbf16>, vector<16x128xf32> -> vector<16x128xf32>
    %29 = arith.addf %26, %28 : vector<16x128xf32>
    %c0_18 = arith.constant 0 : index
    %c0_19 = arith.constant 0 : index
    %30 = vector.load %arg6[%c0_18, %c0_19] : memref<1x128xf32, #tpu.memory_space<vmem>>, vector<1x128xf32>
    %31 = vector.broadcast %30 : vector<1x128xf32> to vector<16x128xf32>
    %32 = arith.addf %29, %31 : vector<16x128xf32>
    %33 = tpu.iota {dimensions = array<i32: 1>} : vector<16x128xi32>
    %c32_i32 = arith.constant 32 : i32
    %34 = vector.broadcast %c32_i32 : i32 to vector<16x128xi32>
    %35 = arith.cmpi slt, %33, %34 : vector<16x128xi32>
    %cst_20 = arith.constant 0xFF800000 : f32
    %36 = vector.broadcast %cst_20 : f32 to vector<16x128xf32>
    %37 = arith.select %35, %32, %36 : vector<16x128xi1>, vector<16x128xf32>
    %cst_21 = arith.constant dense<0xFF800000> : vector<16xf32>
    %38 = vector.multi_reduction <maximumf>, %37, %cst_21 [1] : vector<16x128xf32> to vector<16xf32>
    %39 = vector.shape_cast %38 : vector<16xf32> to vector<16x1xf32>
    %40 = vector.broadcast %39 : vector<16x1xf32> to vector<16x128xf32>
    %41 = arith.subf %37, %40 : vector<16x128xf32>
    %42 = math.exp %41 : vector<16x128xf32>
    %cst_22 = arith.constant dense<0.000000e+00> : vector<16xf32>
    %43 = vector.multi_reduction <add>, %42, %cst_22 [1] : vector<16x128xf32> to vector<16xf32>
    %44 = vector.shape_cast %43 : vector<16xf32> to vector<16x1xf32>
    %45 = tpu.reciprocal %44 : vector<16x1xf32> -> vector<16x1xf32>
    %46 = vector.broadcast %45 : vector<16x1xf32> to vector<16x128xf32>
    %47 = arith.mulf %42, %46 : vector<16x128xf32>
    %48 = vector.shape_cast %47 : vector<16x128xf32> to vector<2x8x128xf32>
    %c0_23 = arith.constant 0 : index
    %c0_24 = arith.constant 0 : index
    %c0_25 = arith.constant 0 : index
    %49 = vector.load %arg7[%c0_23, %c0_24, %c0_25] : memref<2x8x128xf32, #tpu.memory_space<vmem>>, vector<2x8x128xf32>
    tpu.vector_store %arg7[%c0_23, %c0_24, %c0_25], %48 {strides = array<i32>} : memref<2x8x128xf32, #tpu.memory_space<vmem>>, vector<2x8x128xf32>,
    return
  }
  func.func @transform_0(%arg0: i32) -> (i32, i32, i32) {
    %c0_i32 = arith.constant 0 : i32
    %c0_i32_0 = arith.constant 0 : i32
    %c0_i32_1 = arith.constant 0 : i32
    return %arg0, %c0_i32, %c0_i32_0 : i32, i32, i32
  }
  func.func @transform_1(%arg0: i32) -> (i32, i32, i32) {
    %c0_i32 = arith.constant 0 : i32
    %c0_i32_0 = arith.constant 0 : i32
    %c0_i32_1 = arith.constant 0 : i32
    return %arg0, %c0_i32, %c0_i32_0 : i32, i32, i32
  }
  func.func @transform_2(%arg0: i32) -> (i32, i32, i32) {
    %c0_i32 = arith.constant 0 : i32
    %c0_i32_0 = arith.constant 0 : i32
    %c0_i32_1 = arith.constant 0 : i32
    return %arg0, %c0_i32, %c0_i32_0 : i32, i32, i32
  }
  func.func @transform_3(%arg0: i32) -> (i32, i32) {
    %c0_i32 = arith.constant 0 : i32
    %c0_i32_0 = arith.constant 0 : i32
    %c0_i32_1 = arith.constant 0 : i32
    return %c0_i32, %c0_i32_0 : i32, i32
  }
  func.func @transform_4(%arg0: i32) -> (i32, i32) {
    %c0_i32 = arith.constant 0 : i32
    %c0_i32_0 = arith.constant 0 : i32
    %c0_i32_1 = arith.constant 0 : i32
    return %c0_i32, %c0_i32_0 : i32, i32
  }
  func.func @transform_5(%arg0: i32) -> (i32, i32) {
    %c0_i32 = arith.constant 0 : i32
    %c0_i32_0 = arith.constant 0 : i32
    %c0_i32_1 = arith.constant 0 : i32
    return %c0_i32, %c0_i32_0 : i32, i32
  }
  func.func @transform_6(%arg0: i32) -> (i32, i32, i32) {
    %c0_i32 = arith.constant 0 : i32
    %c0_i32_0 = arith.constant 0 : i32
    %c0_i32_1 = arith.constant 0 : i32
    return %arg0, %c0_i32, %c0_i32_0 : i32, i32, i32
  }
}

</mosaic_0001>

<llo_original>
// kernel: tpu_custom_call.1
$region0: #{tpu_custom_call.1}
  #allocation0 [shape = 'u32[]', space=smem, size = 0x4, offset = 0x4, fixed_abs, tag = 'smem constant byte address 0x4 - core index']
  #allocation1 [shape = 'u32[72,128]{1,0:T(1,128)}', space=vmem, size = 0x9000, scoped, tag = 'internal scratch']
  %s0 = inlined_call_operand.hbm [shape: f32[2,8,32], index: 0, kind: input, shape index: {}]
  %s1 = inlined_call_operand.hbm [shape: f32[2,8,32], index: 1, kind: input, shape index: {}]
  %s2 = inlined_call_operand.hbm [shape: f32[2,8,32], index: 2, kind: input, shape index: {}]
  %s3 = inlined_call_operand.hbm [shape: bf16[32,128], index: 3, kind: input, shape index: {}]
  %s4 = inlined_call_operand.hbm [shape: bf16[32,128], index: 4, kind: input, shape index: {}]
  %s5 = inlined_call_operand.vmem [shape: f32[1,128], index: 5, kind: input, shape index: {}]
  %s6 = inlined_call_operand.hbm [shape: f32[2,8,128], index: 6, kind: output, shape index: {}]
  %s7 = sld [smem:[#allocation0]]
  $region54: #{tpu_custom_call.1} parent=0
    _
  %s9 = ssub.s32 1, %s7
  %s10 = scalar_select 0, %s9, %s7
  $region1: #{tpu_custom_call.1} parent=0
    #allocation2 [shape = 'u8[8192]{0}', space=vmem, size = 0x2000, scoped, tag = 'input window, operand 0, single buffered']
    #allocation3 [shape = 's32[1]{0}', space=sflag, size = 0x4, scoped, tag = 'scoped memory for tpu_custom_call.1']
    #allocation4 [shape = 's32[1]{0}', space=sflag, size = 0x4, scoped, tag = 'scoped memory for tpu_custom_call.1']
    #allocation5 [shape = 'u8[8192]{0}', space=vmem, size = 0x2000, scoped, tag = 'input window, operand 1, single buffered']
    #allocation6 [shape = 's32[1]{0}', space=sflag, size = 0x4, scoped, tag = 'scoped memory for tpu_custom_call.1']
    #allocation7 [shape = 'u8[8192]{0}', space=vmem, size = 0x2000, scoped, tag = 'input window, operand 2, single buffered']
    #allocation8 [shape = 'u8[8192]{0}', space=vmem, size = 0x2000, scoped, tag = 'input window, operand 3, single buffered']
    #allocation9 [shape = 's32[1]{0}', space=sflag, size = 0x4, scoped, tag = 'scoped memory for tpu_custom_call.1']
    #allocation10 [shape = 'u8[8192]{0}', space=vmem, size = 0x2000, scoped, tag = 'input window, operand 4, single buffered']
    #allocation11 [shape = 'u8[8192]{0}', space=vmem, size = 0x2000, scoped, tag = 'output window, operand 0, single buffered']
    %11 = vsyncpa [#allocation3], 0
    %12 = vsyncpa [#allocation6], 0
    %13 = vsyncpa [#allocation9], 0
    %14 = vsyncpa [#allocation4], 0
    // Predicated region
    $region2: #{tpu_custom_call.1} parent=1 // pred_check
      _
    $region3: #{tpu_custom_call.1} parent=1 // pred_check_branch
      %16 = sbr.rel (0) target = $region5
    $region4: #{tpu_custom_call.1} parent=1 // pred_region
      %18 = vsyncadd [#allocation3], 0
      %s19 = sshll.u32 %s0, 4
      %s20 = int_to_ptr.hbm [resolvable:$true] %s19
      %s21 = sshll.u32 [#allocation2], 4
      %s22 = int_to_ptr.vmem [resolvable:$true] %s21
      %27 = dma.hbm_to_vmem [thread:$0]  %s20, 256, %s22, [#allocation3], 128, 128, 8
    $region5: #{tpu_custom_call.1} parent=1 // pred_fallthru
      _
    // Predicated region
    $region6: #{tpu_custom_call.1} parent=1 // pred_check
      _
    $region7: #{tpu_custom_call.1} parent=1 // pred_check_branch
      %29 = sbr.rel (0) target = $region9
    $region8: #{tpu_custom_call.1} parent=1 // pred_region
      %31 = vsyncadd [#allocation6], 0
      %s32 = sshll.u32 %s1, 4
      %s33 = int_to_ptr.hbm [resolvable:$true] %s32
      %s34 = sshll.u32 [#allocation5], 4
      %s35 = int_to_ptr.vmem [resolvable:$true] %s34
      %40 = dma.hbm_to_vmem [thread:$0]  %s33, 256, %s35, [#allocation6], 128, 128, 8
    $region9: #{tpu_custom_call.1} parent=1 // pred_fallthru
      _
    // Predicated region
    $region10: #{tpu_custom_call.1} parent=1 // pred_check
      _
    $region11: #{tpu_custom_call.1} parent=1 // pred_check_branch
      %42 = sbr.rel (0) target = $region13
    $region12: #{tpu_custom_call.1} parent=1 // pred_region
      %44 = vsyncadd [#allocation6], 0
      %s45 = sshll.u32 %s2, 4
      %s46 = int_to_ptr.hbm [resolvable:$true] %s45
      %s47 = sshll.u32 [#allocation7], 4
      %s48 = int_to_ptr.vmem [resolvable:$true] %s47
      %53 = dma.hbm_to_vmem [thread:$0]  %s46, 256, %s48, [#allocation6], 128, 128, 8
    $region13: #{tpu_custom_call.1} parent=1 // pred_fallthru
      _
    // Predicated region
    $region14: #{tpu_custom_call.1} parent=1 // pred_check
      _
    $region15: #{tpu_custom_call.1} parent=1 // pred_check_branch
      %55 = sbr.rel (0) target = $region17
    $region16: #{tpu_custom_call.1} parent=1 // pred_region
      %57 = vsyncadd [#allocation9], 0
      %s58 = sshll.u32 %s3, 4
      %s59 = int_to_ptr.hbm [resolvable:$true] %s58
      %s60 = sshll.u32 [#allocation8], 4
      %s61 = int_to_ptr.vmem [resolvable:$true] %s60
      %66 = dma.hbm_to_vmem [thread:$0]  %s59, 256, %s61, [#allocation9], 64, 64, 4
    $region17: #{tpu_custom_call.1} parent=1 // pred_fallthru
      _
    // Predicated region
    $region18: #{tpu_custom_call.1} parent=1 // pred_check
      _
    $region19: #{tpu_custom_call.1} parent=1 // pred_check_branch
      %68 = sbr.rel (0) target = $region21
    $region20: #{tpu_custom_call.1} parent=1 // pred_region
      %70 = vsyncadd [#allocation9], 0
      %s71 = sshll.u32 %s4, 4
      %s72 = int_to_ptr.hbm [resolvable:$true] %s71
      %s73 = sshll.u32 [#allocation10], 4
      %s74 = int_to_ptr.vmem [resolvable:$true] %s73
      %79 = dma.hbm_to_vmem [thread:$0]  %s72, 256, %s74, [#allocation9], 64, 64, 4
    $region21: #{tpu_custom_call.1} parent=1 // pred_fallthru
      _
    // Predicated region
    $region22: #{tpu_custom_call.1} parent=1 // pred_check
      _
    $region23: #{tpu_custom_call.1} parent=1 // pred_check_branch
      %81 = sbr.rel (0) target = $region25
    $region24: #{tpu_custom_call.1} parent=1 // pred_region
      _
    $region25: #{tpu_custom_call.1} parent=1 // pred_fallthru
      _
    // Predicated region
    $region26: #{tpu_custom_call.1} parent=1 // pred_check
      _
    $region27: #{tpu_custom_call.1} parent=1 // pred_check_branch
      %83 = sbr.rel (0) target = $region29
    $region28: #{tpu_custom_call.1} parent=1 // pred_region
      %85 = dma.done [#allocation3], 256
    $region29: #{tpu_custom_call.1} parent=1 // pred_fallthru
      _
    // Predicated region
    $region30: #{tpu_custom_call.1} parent=1 // pred_check
      _
    $region31: #{tpu_custom_call.1} parent=1 // pred_check_branch
      %87 = sbr.rel (0) target = $region33
    $region32: #{tpu_custom_call.1} parent=1 // pred_region
      %89 = dma.done [#allocation6], 256
    $region33: #{tpu_custom_call.1} parent=1 // pred_fallthru
      _
    // Predicated region
    $region34: #{tpu_custom_call.1} parent=1 // pred_check
      _
    $region35: #{tpu_custom_call.1} parent=1 // pred_check_branch
      %91 = sbr.rel (0) target = $region37
    $region36: #{tpu_custom_call.1} parent=1 // pred_region
      %93 = dma.done [#allocation6], 256
    $region37: #{tpu_custom_call.1} parent=1 // pred_fallthru
      _
    // Predicated region
    $region38: #{tpu_custom_call.1} parent=1 // pred_check
      _
    $region39: #{tpu_custom_call.1} parent=1 // pred_check_branch
      %95 = sbr.rel (0) target = $region41
    $region40: #{tpu_custom_call.1} parent=1 // pred_region
      %97 = dma.done [#allocation9], 256
    $region41: #{tpu_custom_call.1} parent=1 // pred_fallthru
      _
    // Predicated region
    $region42: #{tpu_custom_call.1} parent=1 // pred_check
      _
    $region43: #{tpu_custom_call.1} parent=1 // pred_check_branch
      %99 = sbr.rel (0) target = $region45
    $region44: #{tpu_custom_call.1} parent=1 // pred_region
      %101 = dma.done [#allocation9], 256
    $region45: #{tpu_custom_call.1} parent=1 // pred_fallthru
      _
    %v103 = vld [vmem:[#allocation2] sm:$0xff]
    %v104 = vld [vmem:[#allocation2 + $0x8] sm:$0xff]
    %v105 = vld [vmem:[#allocation5] sm:$0xff]
    %v106 = vld [vmem:[#allocation5 + $0x8] sm:$0xff]
    %v107 = vld [vmem:[#allocation7] sm:$0xff]
    %v108 = vld [vmem:[#allocation7 + $0x8] sm:$0xff]
    %v109 = vmul.f32 %v103, 0.17677669
    %v110 = vmul.f32 %v104, 0.17677669
    %v111 = vpack.c.bf16 %v109, %v109
    %v112 = vpack.c.bf16 %v110, %v110
    %v113 = vpack.c.bf16 %v105, %v105
    %v114 = vpack.c.bf16 %v106, %v106
    %vm115 = vcmask 261120
    %v117 = vsel %vm115, %v111, 0
    %v120 = vsel %vm115, %v113, 0
    %122 = vmatpush.bf16.xpose.msra.mxu0 0
    %123 = vmatpush.bf16.xpose.msra.mxu0 0
    %124 = vmatpush.bf16.xpose.msra.mxu0 0
    %125 = vmatpush.bf16.xpose.msra.mxu0 0
    %126 = vmatpush.bf16.xpose.msra.mxu0 0
    %127 = vmatpush.bf16.xpose.msra.mxu0 0
    %128 = vmatpush.bf16.xpose.msra.mxu0 0
    %129 = vmatpush.bf16.xpose.msra.mxu0 %v120
    %130 = vmatmul.bf16.gmra.mxu0 %v117
    %v131 = vpop.f32.mrf.mxu0
    %v132 = vadd.f32 0.0, %v131
    %v133 = vpop.f32.mrf.mxu0
    %134 = vdwg.mxu0
    %v136 = vsel %vm115, %v112, 0
    %v139 = vsel %vm115, %v114, 0
    %141 = vmatpush.bf16.xpose.msra.mxu0 0
    %142 = vmatpush.bf16.xpose.msra.mxu0 0
    %143 = vmatpush.bf16.xpose.msra.mxu0 0
    %144 = vmatpush.bf16.xpose.msra.mxu0 0
    %145 = vmatpush.bf16.xpose.msra.mxu0 0
    %146 = vmatpush.bf16.xpose.msra.mxu0 0
    %147 = vmatpush.bf16.xpose.msra.mxu0 0
    %148 = vmatpush.bf16.xpose.msra.mxu0 %v139
    %149 = vmatmul.bf16.gmra.mxu0 %v136
    %v150 = vpop.f32.mrf.mxu0
    %v151 = vadd.f32 0.0, %v150
    %v152 = vpop.f32.mrf.mxu0
    %153 = vdwg.mxu0
    %vm154 = vcmask 64512
    %v155 = vsel %vm154, %v132, -inf
    %156 = vmax.xlane.f32.xlu0 %v155
    %v157 = vpop.xlane.xlu0 %156
    %v158 = vsel %vm154, %v151, -inf
    %159 = vmax.xlane.f32.xlu0 %v158
    %v160 = vpop.xlane.xlu0 %159
    %v161 = vsub.f32 %v132, %v157
    %v162 = vsub.f32 %v151, %v160
    %v163 = vmul.f32 %v161, 1.442695
    %v164 = vpow.pop %v163
    %v165 = vmul.f32 %v162, 1.442695
    %v166 = vpow.pop %v165
    %v167 = vsel %vm154, %v164, 0.0
    %168 = vadd.xlane.f32.xlu0 %v167
    %v169 = vpop.xlane.xlu0 %168
    %v170 = vsel %vm154, %v166, 0.0
    %171 = vadd.xlane.f32.xlu0 %v170
    %v172 = vpop.xlane.xlu0 %171
    %v173 = vrcp.pop %v169
    %v174 = vrcp.pop %v172
    %v175 = vmul.f32 %v164, %v173
    %v176 = vmul.f32 %v166, %v174
    %v177 = vpack.c.bf16 %v175, %v175
    %v178 = vpack.c.bf16 %v176, %v176
    %v179 = vpack.c.bf16 %v107, %v107
    %v180 = vpack.c.bf16 %v108, %v108
    %v182 = vsel %vm154, %v177, 0
    %vm184 = vcmask 1043456
    %v186 = vsel %vm184, %v179, 0
    %188 = vmatpush.bf16.msra.mxu0 0
    %189 = vmatpush.bf16.msra.mxu0 0
    %190 = vmatpush.bf16.msra.mxu0 0
    %191 = vmatpush.bf16.msra.mxu0 0
    %192 = vmatpush.bf16.msra.mxu0 0
    %193 = vmatpush.bf16.msra.mxu0 0
    %194 = vmatpush.bf16.msra.mxu0 0
    %195 = vmatpush.bf16.msra.mxu0 %v186
    %196 = vmatmul.bf16.gmra.mxu0 %v182
    %v197 = vpop.f32.mrf.mxu0
    %v198 = vadd.f32 0.0, %v197
    %v199 = vpop.f32.mrf.mxu0
    %200 = vdwg.mxu0
    %v202 = vsel %vm154, %v178, 0
    %v205 = vsel %vm184, %v180, 0
    %207 = vmatpush.bf16.msra.mxu0 0
    %208 = vmatpush.bf16.msra.mxu0 0
    %209 = vmatpush.bf16.msra.mxu0 0
    %210 = vmatpush.bf16.msra.mxu0 0
    %211 = vmatpush.bf16.msra.mxu0 0
    %212 = vmatpush.bf16.msra.mxu0 0
    %213 = vmatpush.bf16.msra.mxu0 0
    %214 = vmatpush.bf16.msra.mxu0 %v205
    %215 = vmatmul.bf16.gmra.mxu0 %v202
    %v216 = vpop.f32.mrf.mxu0
    %v217 = vadd.f32 0.0, %v216
    %v218 = vpop.f32.mrf.mxu0
    %219 = vdwg.mxu0
    %v220 = vpack.c.bf16 %v104, %v103
    %v221 = vpack.c.bf16 %v217, %v198
    %v222 = vld [vmem:[#allocation8] sm:$0xf]
    %v223 = vld [vmem:[#allocation8 + $0x4] sm:$0xf]
    %v224 = vld [vmem:[#allocation8 + $0x8] sm:$0xf]
    %v225 = vld [vmem:[#allocation8 + $0xc] sm:$0xf]
    %v226 = vld [vmem:[#allocation10] sm:$0xf]
    %v227 = vld [vmem:[#allocation10 + $0x4] sm:$0xf]
    %v228 = vld [vmem:[#allocation10 + $0x8] sm:$0xf]
    %v229 = vld [vmem:[#allocation10 + $0xc] sm:$0xf]
    %v234 = vunpack.c.l.b16 %v226
    %v235 = vunpack.c.l.b16 %v227
    %v236 = vunpack.c.l.b16 %v228
    %v237 = vunpack.c.l.b16 %v229
    %v238 = vpack.c.b16 %v235, %v234
    %v239 = vpack.c.b16 %v237, %v236
    %v243 = vsel %vm115, %v221, 0
    %245 = vmatpush.bf16.msra.mxu0 0
    %246 = vmatpush.bf16.msra.mxu0 0
    %247 = vmatpush.bf16.msra.mxu0 0
    %248 = vmatpush.bf16.msra.mxu0 0
    %249 = vmatpush.bf16.msra.mxu0 0
    %250 = vmatpush.bf16.msra.mxu0 0
    %251 = vmatpush.bf16.msra.mxu0 %v239
    %252 = vmatpush.bf16.msra.mxu0 %v238
    %253 = vmatmul.bf16.gmra.mxu0 %v243
    %v254 = vpop.f32.mrf.mxu0
    %v255 = vadd.f32 0.0, %v254
    %v256 = vpop.f32.mrf.mxu0
    %v257 = vadd.f32 0.0, %v256
    %258 = vdwg.mxu0
    %v263 = vunpack.c.l.b16 %v222
    %v264 = vunpack.c.l.b16 %v223
    %v265 = vunpack.c.l.b16 %v224
    %v266 = vunpack.c.l.b16 %v225
    %v267 = vpack.c.b16 %v264, %v263
    %v268 = vpack.c.b16 %v266, %v265
    %v272 = vsel %vm115, %v220, 0
    %274 = vmatpush.bf16.msra.mxu0 0
    %275 = vmatpush.bf16.msra.mxu0 0
    %276 = vmatpush.bf16.msra.mxu0 0
    %277 = vmatpush.bf16.msra.mxu0 0
    %278 = vmatpush.bf16.msra.mxu0 0
    %279 = vmatpush.bf16.msra.mxu0 0
    %280 = vmatpush.bf16.msra.mxu0 %v268
    %281 = vmatpush.bf16.msra.mxu0 %v267
    %282 = vmatmul.bf16.gmra.mxu0 %v272
    %v283 = vpop.f32.mrf.mxu0
    %v284 = vadd.f32 %v255, %v283
    %v285 = vpop.f32.mrf.mxu0
    %v286 = vadd.f32 %v257, %v285
    %287 = vdwg.mxu0
    %v288 = vld [vmem:[%s5] sm:$0x1]
    %v290 = vperm.slane %v288, 0
    %v292 = vadd.f32 %v284, %v290
    %v293 = vadd.f32 %v286, %v290
    %v294 = vlaneseq
    %v295 = vand.u32 %v294, 127
    %vm296 = vcmp.lt.s32.totalorder %v295, 32
    %v297 = vsel %vm296, %v292, -inf
    %v298 = vsel %vm296, %v293, -inf
    %299 = vmax.xlane.f32.xlu0 %v297
    %v300 = vpop.xlane.xlu0 %299
    %301 = vmax.xlane.f32.xlu0 %v298
    %v302 = vpop.xlane.xlu0 %301
    %v303 = vsub.f32 %v297, %v300
    %v304 = vsub.f32 %v298, %v302
    %v305 = vmul.f32 %v303, 1.442695
    %v306 = vpow.pop %v305
    %v307 = vmul.f32 %v304, 1.442695
    %v308 = vpow.pop %v307
    %309 = vadd.xlane.f32.xlu0 %v306
    %v310 = vpop.xlane.xlu0 %309
    %311 = vadd.xlane.f32.xlu0 %v308
    %v312 = vpop.xlane.xlu0 %311
    %v313 = vrcp.pop %v310
    %v314 = vmul.f32 %v310, %v313
    %v315 = vsub.f32 1.0, %v314
    %v316 = vmul.f32 %v313, %v315
    %v317 = vadd.f32 %v313, %v316
    %vm318 = vweird.f32 %v310
    %vm319 = vweird.f32 %v313
    %vm320 = vmor %vm318, %vm319
    %v321 = vsel %vm320, %v313, %v317
    %v322 = vand.u32 2147483647, %v310
    %vm323 = vcmp.eq.f32.partialorder %v322, 8.507059e+37
    %v324 = vand.u32 %v310, 2147483648
    %v325 = vor.u32 1.1754944e-38, %v324
    %v326 = vsel %vm323, %v325, %v321
    %v327 = vrcp.pop %v312
    %v328 = vmul.f32 %v312, %v327
    %v329 = vsub.f32 1.0, %v328
    %v330 = vmul.f32 %v327, %v329
    %v331 = vadd.f32 %v327, %v330
    %vm332 = vweird.f32 %v312
    %vm333 = vweird.f32 %v327
    %vm334 = vmor %vm332, %vm333
    %v335 = vsel %vm334, %v327, %v331
    %v336 = vand.u32 2147483647, %v312
    %vm337 = vcmp.eq.f32.partialorder %v336, 8.507059e+37
    %v338 = vand.u32 %v312, 2147483648
    %v339 = vor.u32 1.1754944e-38, %v338
    %v340 = vsel %vm337, %v339, %v335
    %v341 = vmul.f32 %v306, %v326
    %v342 = vmul.f32 %v308, %v340
    %343 = vst [vmem:[#allocation11] sm:$0xff] %v341
    %344 = vst [vmem:[#allocation11 + $0x8] sm:$0xff] %v342
    // Predicated region
    $region46: #{tpu_custom_call.1} parent=1 // pred_check
      _
    $region47: #{tpu_custom_call.1} parent=1 // pred_check_branch
      %346 = sbr.rel (0) target = $region49
    $region48: #{tpu_custom_call.1} parent=1 // pred_region
      %348 = vsyncadd [#allocation4], 0
      %s349 = sshll.u32 [#allocation11], 4
      %s350 = int_to_ptr.vmem [resolvable:$true] %s349
      %s351 = sshll.u32 %s6, 4
      %s352 = int_to_ptr.hbm [resolvable:$true] %s351
      %357 = dma.vmem_to_hbm [thread:$0]  %s350, 256, %s352, [#allocation4], 128, 128, 8
    $region49: #{tpu_custom_call.1} parent=1 // pred_fallthru
      _
    // Predicated region
    $region50: #{tpu_custom_call.1} parent=1 // pred_check
      _
    $region51: #{tpu_custom_call.1} parent=1 // pred_check_branch
      %359 = sbr.rel (0) target = $region53
    $region52: #{tpu_custom_call.1} parent=1 // pred_region
      %361 = dma.done [#allocation4], 256
    $region53: #{tpu_custom_call.1} parent=1 // pred_fallthru
      _
    %362 = vsyncpa [#allocation3], 1
    %363 = vsyncpa [#allocation6], 1
    %364 = vsyncpa [#allocation9], 1
    %365 = vsyncpa [#allocation4], 1

</llo_original>
